<compile_context>
chip_gen: v7x
topology: tpu7x:2x2x1
jax: 0.10.0
libtpu: 0.0.40
codegen_flags: <defaults>
</compile_context>

<pallas_src>
import jax
import jax.numpy as jnp
from jax import lax
from jax.experimental import pallas as pl
from jax.experimental.pallas import tpu as pltpu

# ----------------------- module hyper-parameters ------------------------------
EMBED = 32
HEADS = 4
HEAD_DIM = EMBED // HEADS


def _mm_nt(x, w):
    # x @ w.T  (PyTorch nn.Linear convention W[out_features, in_features]),
    # f32 accumulation on the MXU.
    return lax.dot_general(x, w, (((1,), (1,)), ((), ())),
                           preferred_element_type=jnp.float32)


# ------------------------------ fused kernel ----------------------------------
def _self_attention_kernel(qs_ref, ks_ref, v_ref, m_ref,
                           wq_ref, wk_ref, wv_ref, wo_ref, bo_ref,
                           bmat_ref, gmat_ref, sel_ref, o_ref):
    # qs_ref: (N*H*Lq, D) head-stacked queries     ks_ref: (N*H*Lk, D)
    # v_ref : (N*Lv, E)                            m_ref : (N*H*Lq, N*H*Lk)
    # wq/wk : (D, D) per-head Linear (no bias)     wv    : block-diag (E, E)
    # wo    : (E, E), bo: (1, E)
    # bmat  : (N*H*Lq, E) head-lane indicator      gmat  : (N*Lq, N*H*Lq)
    # sel   : (N*Lq, N*Lv) per-batch value-sum + query-broadcast selector
    # o_ref : (N*Lq, E)
    inv_scale = 1.0 / (float(EMBED) ** 0.5)

    # Projections (single MXU op each, no per-head loop).
    qh = _mm_nt(qs_ref[...], wq_ref[...])          # (N*H*Lq, D)
    kh = _mm_nt(ks_ref[...], wk_ref[...])          # (N*H*Lk, D)
    vh = _mm_nt(v_ref[...], wv_ref[...])           # (N*Lv, E)

    # One matmul gives every (batch, head) energy block; off-block entries are
    # masked to -1e20 just like reference masked positions, so a single
    # row-wise softmax equals the per-head reference softmax.
    energy = _mm_nt(qh, kh)                        # (N*H*Lq, N*H*Lk)
    energy = jnp.where(m_ref[...] == 0.0, jnp.float32(-1e20), energy)
    scaled = energy * inv_scale
    mmax = jnp.max(scaled, axis=-1, keepdims=True)
    p = jnp.exp(scaled - mmax)
    soft = p / jnp.sum(p, axis=-1, keepdims=True)
    row_sum = jnp.sum(soft, axis=-1, keepdims=True)          # (N*H*Lq, 1) ~= 1

    # attn[n*Lq+q, h*D+d] = row_sum[n,h,q] * sum_v vh[n,v,h,d]
    rs_wide = jnp.dot(gmat_ref[...], row_sum * bmat_ref[...],
                      preferred_element_type=jnp.float32)    # (N*Lq, E)
    v_wide = jnp.dot(sel_ref[...], vh,
                     preferred_element_type=jnp.float32)     # (N*Lq, E)
    attn = rs_wide * v_wide                                  # (N*Lq, E)

    # Output Linear (with bias).
    o_ref[...] = _mm_nt(attn, wo_ref[...]) + bo_ref[...]


# ------------------------------ wrapper ----------------------------------------
def self_attention(keys, values, query, mask, params):
    N, Lq, E = query.shape
    Lk = keys.shape[1]
    Lv = values.shape[1]
    H, D = HEADS, HEAD_DIM
    assert E == EMBED
    f32 = jnp.float32

    def to_heads(x, L):
        # (N, L, E) -> (N*H*L, D), rows ordered (n, h, l)  — layout plumbing
        # done once in the wrapper so the kernel needs no relayouts.
        return (x.reshape(N, L, H, D).transpose(0, 2, 1, 3)
                 .reshape(N * H * L, D).astype(f32))

    qs = to_heads(query, Lq)
    ks = to_heads(keys, Lk)
    v2 = values.reshape(N * Lv, E).astype(f32)

    # Block-diagonal mask over (batch, head) blocks; mask broadcasts over heads.
    m = mask.astype(f32)
    big_mask = jax.scipy.linalg.block_diag(
        *[m[n] for n in range(N) for _ in range(H)])          # (N*H*Lq, N*H*Lk)

    # Constant routing matrices (baked at trace time).
    bmat = jnp.tile(jnp.kron(jnp.eye(H, dtype=f32),
                             jnp.ones((Lq, D), f32)), (N, 1))  # (N*H*Lq, E)
    gmat = jnp.kron(jnp.eye(N, dtype=f32),
                    jnp.kron(jnp.ones((1, H), f32),
                             jnp.eye(Lq, dtype=f32)))          # (N*Lq, N*H*Lq)
    sel = jnp.kron(jnp.eye(N, dtype=f32), jnp.ones((Lq, Lv), f32))  # (N*Lq, N*Lv)

    # Block-diagonal value projection (single wide matmul in-kernel).
    wv_bd = jax.scipy.linalg.block_diag(*([params["wv"]] * H)).astype(f32)

    vmem = pl.BlockSpec(memory_space=pltpu.MemorySpace.VMEM)
    out2 = pl.pallas_call(
        _self_attention_kernel,
        out_shape=jax.ShapeDtypeStruct((N * Lq, E), f32),
        in_specs=[vmem] * 12,
        out_specs=vmem,
    )(qs, ks, v2, big_mask,
      params["wq"].astype(f32), params["wk"].astype(f32), wv_bd,
      params["wo"].astype(f32), params["bo"].astype(f32),
      bmat, gmat, sel)
    return out2.reshape(N, Lq, E)


# --------------------- pure-JAX reference (PyTorch transcription) ---------------
def _reference_forward(keys, values, query, mask, p):
    N, Lq, E = query.shape
    H, D = HEADS, HEAD_DIM
    hp = lax.Precision.HIGHEST
    split = lambda x: x.reshape(N, x.shape[1], H, D)
    kh = jnp.einsum("nkhd,ed->nkhe", split(keys), p["wk"], precision=hp)
    vh = jnp.einsum("nvhd,ed->nvhe", split(values), p["wv"], precision=hp)
    qh = jnp.einsum("nqhd,ed->nqhe", split(query), p["wq"], precision=hp)
    energy = jnp.einsum("nqhd,nkhd->nhqk", qh, kh, precision=hp)
    energy = jnp.where(mask[:, None, :, :] == 0, jnp.float32(-1e20), energy)
    soft = jax.nn.softmax(energy / (E ** 0.5), axis=3)
    attn = jnp.einsum("nhqk,nvhd->nqhd", soft, vh, precision=hp)  # faithful einsum
    attn = attn.reshape(N, Lq, H * D)
    return jnp.einsum("nqe,fe->nqf", attn, p["wo"], precision=hp) + p["bo"]


# ----------------------------------- main ---------------------------------------
if __name__ == "__main__":
    key = jax.random.PRNGKey(0)
    kk, kv, kq, kp = jax.random.split(key, 4)

    N, L = 2, 8
    keys = jax.random.normal(kk, (N, L, EMBED), jnp.float32)
    values = jax.random.normal(kv, (N, L, EMBED), jnp.float32)
    query = jax.random.normal(kq, (N, L, EMBED), jnp.float32)
    # causal mask, broadcast over heads (1.0 = keep, 0.0 = masked)
    mask = jnp.broadcast_to(jnp.tril(jnp.ones((L, L), jnp.float32))[None], (N, L, L))

    pk = jax.random.split(kp, 5)
    params = {
        "wk": 0.1 * jax.random.normal(pk[0], (HEAD_DIM, HEAD_DIM), jnp.float32),
        "wv": 0.1 * jax.random.normal(pk[1], (HEAD_DIM, HEAD_DIM), jnp.float32),
        "wq": 0.1 * jax.random.normal(pk[2], (HEAD_DIM, HEAD_DIM), jnp.float32),
        "wo": 0.1 * jax.random.normal(pk[3], (EMBED, EMBED), jnp.float32),
        "bo": 0.1 * jax.random.normal(pk[4], (1, EMBED), jnp.float32),
    }

    out = jax.jit(self_attention)(keys, values, query, mask, params)
    out = jax.block_until_ready(out)

    ref = _reference_forward(keys, values, query, mask, params)
    assert out.shape == (N, L, EMBED)
    assert bool(jnp.all(jnp.isfinite(out)))
    # tolerance accommodates possible reduced-precision MXU passes for f32 matmuls
    assert bool(jnp.allclose(out, ref, atol=2e-2, rtol=2e-2)), \
        float(jnp.max(jnp.abs(out - ref)))
    print("KERNEL_OK")
</pallas_src>

<mosaic_0001>
module attributes {stable_mosaic.version = 11 : i64} {
  func.func @_self_attention_kernel(%arg0: memref<64x8xf32, #tpu.memory_space<vmem>>, %arg1: memref<64x8xf32, #tpu.memory_space<vmem>>, %arg2: memref<16x32xf32, #tpu.memory_space<vmem>>, %arg3: memref<64x64xf32, #tpu.memory_space<vmem>>, %arg4: memref<8x8xf32, #tpu.memory_space<vmem>>, %arg5: memref<8x8xf32, #tpu.memory_space<vmem>>, %arg6: memref<32x32xf32, #tpu.memory_space<vmem>>, %arg7: memref<32x32xf32, #tpu.memory_space<vmem>>, %arg8: memref<1x32xf32, #tpu.memory_space<vmem>>, %arg9: memref<64x32xf32, #tpu.memory_space<vmem>>, %arg10: memref<16x64xf32, #tpu.memory_space<vmem>>, %arg11: memref<16x16xf32, #tpu.memory_space<vmem>>, %arg12: memref<16x32xf32, #tpu.memory_space<vmem>>) attributes {dimension_semantics = [], scalar_prefetch = 0 : i64, scratch_operands = 0 : i64, tpu.core_type = #tpu.core_type<tc>} {
    %c0 = arith.constant 0 : index
    %c0_0 = arith.constant 0 : index
    %0 = vector.load %arg0[%c0, %c0_0] : memref<64x8xf32, #tpu.memory_space<vmem>>, vector<64x8xf32>
    %c0_1 = arith.constant 0 : index
    %c0_2 = arith.constant 0 : index
    %1 = vector.load %arg4[%c0_1, %c0_2] : memref<8x8xf32, #tpu.memory_space<vmem>>, vector<8x8xf32>
    %cst = arith.constant dense<0.000000e+00> : vector<64x8xf32>
    %2 = tpu.matmul %0, %1, %cst {dimension_numbers = #tpu.dot_dimension_numbers<[1], [1], [0], [0], [0, 0, 1, 0], [], []>} : vector<64x8xf32>, vector<8x8xf32>, vector<64x8xf32> -> vector<64x8xf32>
    %c0_3 = arith.constant 0 : index
    %c0_4 = arith.constant 0 : index
    %3 = vector.load %arg1[%c0_3, %c0_4] : memref<64x8xf32, #tpu.memory_space<vmem>>, vector<64x8xf32>
    %c0_5 = arith.constant 0 : index
    %c0_6 = arith.constant 0 : index
    %4 = vector.load %arg5[%c0_5, %c0_6] : memref<8x8xf32, #tpu.memory_space<vmem>>, vector<8x8xf32>
    %cst_7 = arith.constant dense<0.000000e+00> : vector<64x8xf32>
    %5 = tpu.matmul %3, %4, %cst_7 {dimension_numbers = #tpu.dot_dimension_numbers<[1], [1], [0], [0], [0, 0, 1, 0], [], []>} : vector<64x8xf32>, vector<8x8xf32>, vector<64x8xf32> -> vector<64x8xf32>
    %c0_8 = arith.constant 0 : index
    %c0_9 = arith.constant 0 : index
    %6 = vector.load %arg2[%c0_8, %c0_9] : memref<16x32xf32, #tpu.memory_space<vmem>>, vector<16x32xf32>
    %c0_10 = arith.constant 0 : index
    %c0_11 = arith.constant 0 : index
    %7 = vector.load %arg6[%c0_10, %c0_11] : memref<32x32xf32, #tpu.memory_space<vmem>>, vector<32x32xf32>
    %cst_12 = arith.constant dense<0.000000e+00> : vector<16x32xf32>
    %8 = tpu.matmul %6, %7, %cst_12 {dimension_numbers = #tpu.dot_dimension_numbers<[1], [1], [0], [0], [0, 0, 1, 0], [], []>} : vector<16x32xf32>, vector<32x32xf32>, vector<16x32xf32> -> vector<16x32xf32>
    %cst_13 = arith.constant dense<0.000000e+00> : vector<64x64xf32>
    %9 = tpu.matmul %2, %5, %cst_13 {dimension_numbers = #tpu.dot_dimension_numbers<[1], [1], [0], [0], [0, 0, 1, 0], [], []>} : vector<64x8xf32>, vector<64x8xf32>, vector<64x64xf32> -> vector<64x64xf32>
    %c0_14 = arith.constant 0 : index
    %c0_15 = arith.constant 0 : index
    %10 = vector.load %arg3[%c0_14, %c0_15] : memref<64x64xf32, #tpu.memory_space<vmem>>, vector<64x64xf32>
    %cst_16 = arith.constant 0.000000e+00 : f32
    %11 = vector.broadcast %cst_16 : f32 to vector<64x64xf32>
    %12 = arith.cmpf oeq, %10, %11 : vector<64x64xf32>
    %cst_17 = arith.constant -1.000000e+20 : f32
    %13 = vector.broadcast %cst_17 : f32 to vector<64x64xf32>
    %14 = arith.select %12, %13, %9 : vector<64x64xi1>, vector<64x64xf32>
    %cst_18 = arith.constant 0.176776692 : f32
    %15 = vector.broadcast %cst_18 : f32 to vector<64x64xf32>
    %16 = arith.mulf %14, %15 : vector<64x64xf32>
    %cst_19 = arith.constant dense<0xFF800000> : vector<64xf32>
    %17 = vector.multi_reduction <maximumf>, %16, %cst_19 [1] : vector<64x64xf32> to vector<64xf32>
    %18 = vector.shape_cast %17 : vector<64xf32> to vector<64x1xf32>
    %19 = vector.broadcast %18 : vector<64x1xf32> to vector<64x64xf32>
    %20 = arith.subf %16, %19 : vector<64x64xf32>
    %21 = math.exp %20 : vector<64x64xf32>
    %cst_20 = arith.constant dense<0.000000e+00> : vector<64xf32>
    %22 = vector.multi_reduction <add>, %21, %cst_20 [1] : vector<64x64xf32> to vector<64xf32>
    %23 = vector.shape_cast %22 : vector<64xf32> to vector<64x1xf32>
    %24 = vector.broadcast %23 : vector<64x1xf32> to vector<64x64xf32>
    %25 = arith.divf %21, %24 : vector<64x64xf32>
    %cst_21 = arith.constant dense<0.000000e+00> : vector<64xf32>
    %26 = vector.multi_reduction <add>, %25, %cst_21 [1] : vector<64x64xf32> to vector<64xf32>
    %27 = vector.shape_cast %26 : vector<64xf32> to vector<64x1xf32>
    %c0_22 = arith.constant 0 : index
    %c0_23 = arith.constant 0 : index
    %28 = vector.load %arg10[%c0_22, %c0_23] : memref<16x64xf32, #tpu.memory_space<vmem>>, vector<16x64xf32>
    %c0_24 = arith.constant 0 : index
    %c0_25 = arith.constant 0 : index
    %29 = vector.load %arg9[%c0_24, %c0_25] : memref<64x32xf32, #tpu.memory_space<vmem>>, vector<64x32xf32>
    %30 = vector.broadcast %27 : vector<64x1xf32> to vector<64x32xf32>
    %31 = arith.mulf %30, %29 : vector<64x32xf32>
    %cst_26 = arith.constant dense<0.000000e+00> : vector<16x32xf32>
    %32 = tpu.matmul %28, %31, %cst_26 {dimension_numbers = #tpu.dot_dimension_numbers<[1], [0], [0], [1], [0, 0, 1, 1], [], []>} : vector<16x64xf32>, vector<64x32xf32>, vector<16x32xf32> -> vector<16x32xf32>
    %c0_27 = arith.constant 0 : index
    %c0_28 = arith.constant 0 : index
    %33 = vector.load %arg11[%c0_27, %c0_28] : memref<16x16xf32, #tpu.memory_space<vmem>>, vector<16x16xf32>
    %cst_29 = arith.constant dense<0.000000e+00> : vector<16x32xf32>
    %34 = tpu.matmul %33, %8, %cst_29 {dimension_numbers = #tpu.dot_dimension_numbers<[1], [0], [0], [1], [0, 0, 1, 1], [], []>} : vector<16x16xf32>, vector<16x32xf32>, vector<16x32xf32> -> vector<16x32xf32>
    %35 = arith.mulf %32, %34 : vector<16x32xf32>
    %c0_30 = arith.constant 0 : index
    %c0_31 = arith.constant 0 : index
    %36 = vector.load %arg7[%c0_30, %c0_31] : memref<32x32xf32, #tpu.memory_space<vmem>>, vector<32x32xf32>
    %cst_32 = arith.constant dense<0.000000e+00> : vector<16x32xf32>
    %37 = tpu.matmul %35, %36, %cst_32 {dimension_numbers = #tpu.dot_dimension_numbers<[1], [1], [0], [0], [0, 0, 1, 0], [], []>} : vector<16x32xf32>, vector<32x32xf32>, vector<16x32xf32> -> vector<16x32xf32>
    %c0_33 = arith.constant 0 : index
    %c0_34 = arith.constant 0 : index
    %38 = vector.load %arg8[%c0_33, %c0_34] : memref<1x32xf32, #tpu.memory_space<vmem>>, vector<1x32xf32>
    %39 = vector.broadcast %38 : vector<1x32xf32> to vector<16x32xf32>
    %40 = arith.addf %37, %39 : vector<16x32xf32>
    %c0_35 = arith.constant 0 : index
    %c0_36 = arith.constant 0 : index
    %41 = vector.load %arg12[%c0_35, %c0_36] : memref<16x32xf32, #tpu.memory_space<vmem>>, vector<16x32xf32>
    tpu.vector_store %arg12[%c0_35, %c0_36], %40 {strides = array<i32>} : memref<16x32xf32, #tpu.memory_space<vmem>>, vector<16x32xf32>,
    return
  }
}

</mosaic_0001>

<llo_original>
// kernel: self_attention.1
$region0: #{self_attention.1}
  #allocation0 [shape = 'u32[]', space=smem, size = 0x4, offset = 0x4, fixed_abs, tag = 'smem constant byte address 0x4 - core index']
  #allocation1 [shape = 'u32[144,128]{1,0:T(1,128)}', space=vmem, size = 0x12000, scoped, tag = 'internal scratch']
  %s0 = inlined_call_operand.vmem [shape: f32[64,8], index: 0, kind: input, shape index: {}]
  %s1 = inlined_call_operand.vmem [shape: f32[64,8], index: 1, kind: input, shape index: {}]
  %s2 = inlined_call_operand.vmem [shape: f32[16,32], index: 2, kind: input, shape index: {}]
  %s3 = inlined_call_operand.vmem [shape: f32[64,64], index: 3, kind: input, shape index: {}]
  %s4 = inlined_call_operand.vmem [shape: f32[8,8], index: 4, kind: input, shape index: {}]
  %s5 = inlined_call_operand.vmem [shape: f32[8,8], index: 5, kind: input, shape index: {}]
  %s6 = inlined_call_operand.vmem [shape: f32[32,32], index: 6, kind: input, shape index: {}]
  %s7 = inlined_call_operand.vmem [shape: f32[32,32], index: 7, kind: input, shape index: {}]
  %s8 = inlined_call_operand.vmem [shape: f32[1,32], index: 8, kind: input, shape index: {}]
  %s9 = inlined_call_operand.vmem [shape: f32[64,32], index: 9, kind: input, shape index: {}]
  %s10 = inlined_call_operand.vmem [shape: f32[16,64], index: 10, kind: input, shape index: {}]
  %s11 = inlined_call_operand.vmem [shape: f32[16,16], index: 11, kind: input, shape index: {}]
  %s12 = inlined_call_operand.hbm [shape: f32[16,32], index: 12, kind: output, shape index: {}]
  %s13 = sld [smem:[#allocation0]]
  $region58: #{self_attention.1} parent=0
    _
  %s15 = ssub.s32 1, %s13
  %s16 = scalar_select 0, %s15, %s13
  $region1: #{self_attention.1} parent=0
    #allocation2 [shape = 'u8[8192]{0}', space=vmem, size = 0x2000, scoped, tag = 'output window, operand 0, single buffered']
    #allocation3 [shape = 's32[1]{0}', space=sflag, size = 0x4, scoped, tag = 'scoped memory for self_attention.1']
    %17 = vsyncpa [#allocation3], 0
    // Predicated region
    $region2: #{self_attention.1} parent=1 // pred_check
      _
    $region3: #{self_attention.1} parent=1 // pred_check_branch
      %19 = sbr.rel (0) target = $region5
    $region4: #{self_attention.1} parent=1 // pred_region
      _
    $region5: #{self_attention.1} parent=1 // pred_fallthru
      _
    // Predicated region
    $region6: #{self_attention.1} parent=1 // pred_check
      _
    $region7: #{self_attention.1} parent=1 // pred_check_branch
      %21 = sbr.rel (0) target = $region9
    $region8: #{self_attention.1} parent=1 // pred_region
      _
    $region9: #{self_attention.1} parent=1 // pred_fallthru
      _
    // Predicated region
    $region10: #{self_attention.1} parent=1 // pred_check
      _
    $region11: #{self_attention.1} parent=1 // pred_check_branch
      %23 = sbr.rel (0) target = $region13
    $region12: #{self_attention.1} parent=1 // pred_region
      _
    $region13: #{self_attention.1} parent=1 // pred_fallthru
      _
    // Predicated region
    $region14: #{self_attention.1} parent=1 // pred_check
      _
    $region15: #{self_attention.1} parent=1 // pred_check_branch
      %25 = sbr.rel (0) target = $region17
    $region16: #{self_attention.1} parent=1 // pred_region
      _
    $region17: #{self_attention.1} parent=1 // pred_fallthru
      _
    // Predicated region
    $region18: #{self_attention.1} parent=1 // pred_check
      _
    $region19: #{self_attention.1} parent=1 // pred_check_branch
      %27 = sbr.rel (0) target = $region21
    $region20: #{self_attention.1} parent=1 // pred_region
      _
    $region21: #{self_attention.1} parent=1 // pred_fallthru
      _
    // Predicated region
    $region22: #{self_attention.1} parent=1 // pred_check
      _
    $region23: #{self_attention.1} parent=1 // pred_check_branch
      %29 = sbr.rel (0) target = $region25
    $region24: #{self_attention.1} parent=1 // pred_region
      _
    $region25: #{self_attention.1} parent=1 // pred_fallthru
      _
    // Predicated region
    $region26: #{self_attention.1} parent=1 // pred_check
      _
    $region27: #{self_attention.1} parent=1 // pred_check_branch
      %31 = sbr.rel (0) target = $region29
    $region28: #{self_attention.1} parent=1 // pred_region
      _
    $region29: #{self_attention.1} parent=1 // pred_fallthru
      _
    // Predicated region
    $region30: #{self_attention.1} parent=1 // pred_check
      _
    $region31: #{self_attention.1} parent=1 // pred_check_branch
      %33 = sbr.rel (0) target = $region33
    $region32: #{self_attention.1} parent=1 // pred_region
      _
    $region33: #{self_attention.1} parent=1 // pred_fallthru
      _
    // Predicated region
    $region34: #{self_attention.1} parent=1 // pred_check
      _
    $region35: #{self_attention.1} parent=1 // pred_check_branch
      %35 = sbr.rel (0) target = $region37
    $region36: #{self_attention.1} parent=1 // pred_region
      _
    $region37: #{self_attention.1} parent=1 // pred_fallthru
      _
    // Predicated region
    $region38: #{self_attention.1} parent=1 // pred_check
      _
    $region39: #{self_attention.1} parent=1 // pred_check_branch
      %37 = sbr.rel (0) target = $region41
    $region40: #{self_attention.1} parent=1 // pred_region
      _
    $region41: #{self_attention.1} parent=1 // pred_fallthru
      _
    // Predicated region
    $region42: #{self_attention.1} parent=1 // pred_check
      _
    $region43: #{self_attention.1} parent=1 // pred_check_branch
      %39 = sbr.rel (0) target = $region45
    $region44: #{self_attention.1} parent=1 // pred_region
      _
    $region45: #{self_attention.1} parent=1 // pred_fallthru
      _
    // Predicated region
    $region46: #{self_attention.1} parent=1 // pred_check
      _
    $region47: #{self_attention.1} parent=1 // pred_check_branch
      %41 = sbr.rel (0) target = $region49
    $region48: #{self_attention.1} parent=1 // pred_region
      _
    $region49: #{self_attention.1} parent=1 // pred_fallthru
      _
    %v42 = vld [vmem:[%s0] sm:$0xff]
    %v43 = vld [vmem:[%s0 + $0x8] sm:$0xff]
    %v44 = vld [vmem:[%s0 + $0x10] sm:$0xff]
    %v45 = vld [vmem:[%s0 + $0x18] sm:$0xff]
    %v46 = vld [vmem:[%s0 + $0x20] sm:$0xff]
    %v47 = vld [vmem:[%s0 + $0x28] sm:$0xff]
    %v48 = vld [vmem:[%s0 + $0x30] sm:$0xff]
    %v49 = vld [vmem:[%s0 + $0x38] sm:$0xff]
    %v50 = vld [vmem:[%s4] sm:$0xff]
    %vm51 = vcmask 64512
    %v53 = vsel %vm51, %v42, 0
    %v56 = vsel %vm51, %v43, 0
    %v59 = vsel %vm51, %v44, 0
    %v62 = vsel %vm51, %v45, 0
    %v65 = vsel %vm51, %v46, 0
    %v68 = vsel %vm51, %v47, 0
    %v71 = vsel %vm51, %v48, 0
    %v74 = vsel %vm51, %v49, 0
    %v77 = vsel %vm51, %v50, 0
    %79 = vmatprep.subr.mxu0 0.0
    %80 = vmatpush1.xpose.msra.mxu0 %v77
    %81 = vmatprep.subr.mxu0 0.0
    %82 = vmatpush1.xpose.msra.mxu0 0.0
    %83 = vmatprep.subr.mxu0 0.0
    %84 = vmatpush1.xpose.msra.mxu0 0.0
    %85 = vmatprep.subr.mxu0 0.0
    %86 = vmatpush1.xpose.msra.mxu0 0.0
    %87 = vmatprep.subr.mxu0 0.0
    %88 = vmatpush1.xpose.msra.mxu0 0.0
    %89 = vmatprep.subr.mxu0 0.0
    %90 = vmatpush1.xpose.msra.mxu0 0.0
    %91 = vmatprep.subr.mxu0 0.0
    %92 = vmatpush1.xpose.msra.mxu0 0.0
    %93 = vmatprep.subr.mxu0 0.0
    %94 = vmatpush1.xpose.msra.mxu0 0.0
    %95 = vmatprep.subr.mxu0 0.0
    %96 = vmatpush1.xpose.msra.mxu0 0.0
    %97 = vmatprep.subr.mxu0 0.0
    %98 = vmatpush1.xpose.msra.mxu0 0.0
    %99 = vmatprep.subr.mxu0 0.0
    %100 = vmatpush1.xpose.msra.mxu0 0.0
    %101 = vmatprep.subr.mxu0 0.0
    %102 = vmatpush1.xpose.msra.mxu0 0.0
    %103 = vmatprep.subr.mxu0 0.0
    %104 = vmatpush1.xpose.msra.mxu0 0.0
    %105 = vmatprep.subr.mxu0 0.0
    %106 = vmatpush1.xpose.msra.mxu0 0.0
    %107 = vmatprep.subr.mxu0 0.0
    %108 = vmatpush1.xpose.msra.mxu0 0.0
    %109 = vmatprep.subr.mxu0 0.0
    %110 = vmatpush1.xpose.msra.mxu0 0.0
    %111 = vmatprep.subr.mxu0 0.0
    %112 = vmatpush1.xpose.msra.mxu0 0.0
    %113 = vmatprep.subr.mxu0 0.0
    %114 = vmatpush1.xpose.msra.mxu0 0.0
    %115 = vmatprep.subr.mxu0 0.0
    %116 = vmatpush1.xpose.msra.mxu0 0.0
    %117 = vmatprep.subr.mxu0 0.0
    %118 = vmatpush1.xpose.msra.mxu0 0.0
    %119 = vmatprep.subr.mxu0 0.0
    %120 = vmatpush1.xpose.msra.mxu0 0.0
    %121 = vmatprep.subr.mxu0 0.0
    %122 = vmatpush1.xpose.msra.mxu0 0.0
    %123 = vmatprep.subr.mxu0 0.0
    %124 = vmatpush1.xpose.msra.mxu0 0.0
    %125 = vmatprep.subr.mxu0 0.0
    %126 = vmatpush1.xpose.msra.mxu0 0.0
    %127 = vmatprep.subr.mxu0 0.0
    %128 = vmatpush1.xpose.msra.mxu0 0.0
    %129 = vmatprep.subr.mxu0 0.0
    %130 = vmatpush1.xpose.msra.mxu0 0.0
    %131 = vmatprep.subr.mxu0 0.0
    %132 = vmatpush1.xpose.msra.mxu0 0.0
    %133 = vmatprep.subr.mxu0 0.0
    %134 = vmatpush1.xpose.msra.mxu0 0.0
    %135 = vmatprep.subr.mxu0 0.0
    %136 = vmatpush1.xpose.msra.mxu0 0.0
    %137 = vmatprep.subr.mxu0 0.0
    %138 = vmatpush1.xpose.msra.mxu0 0.0
    %139 = vmatprep.subr.mxu0 0.0
    %140 = vmatpush1.xpose.msra.mxu0 0.0
    %141 = vmatprep.subr.mxu0 0.0
    %142 = vmatpush1.xpose.msra.mxu0 0.0
    %143 = vmatprep.mubr.f32.mxu0 0.0
    %144 = vmatmul.mubr.f32.gmra.mrb[0].mxu0 %v53
    %v145 = vpop.f32.mrb[0].mxu0
    %v146 = vadd.f32 0.0, %v145
    %v147 = vpop.f32.mrb[0].mxu0
    %148 = vmatprep.mubr.f32.mxu0 0.0
    %149 = vmatmul.mubr.f32.gmra.mrb[0].mxu0 %v56
    %v150 = vpop.f32.mrb[0].mxu0
    %v151 = vadd.f32 0.0, %v150
    %v152 = vpop.f32.mrb[0].mxu0
    %153 = vmatprep.mubr.f32.mxu0 0.0
    %154 = vmatmul.mubr.f32.gmra.mrb[0].mxu0 %v59
    %v155 = vpop.f32.mrb[0].mxu0
    %v156 = vadd.f32 0.0, %v155
    %v157 = vpop.f32.mrb[0].mxu0
    %158 = vmatprep.mubr.f32.mxu0 0.0
    %159 = vmatmul.mubr.f32.gmra.mrb[0].mxu0 %v62
    %v160 = vpop.f32.mrb[0].mxu0
    %v161 = vadd.f32 0.0, %v160
    %v162 = vpop.f32.mrb[0].mxu0
    %163 = vmatprep.mubr.f32.mxu0 0.0
    %164 = vmatmul.mubr.f32.gmra.mrb[0].mxu0 %v65
    %v165 = vpop.f32.mrb[0].mxu0
    %v166 = vadd.f32 0.0, %v165
    %v167 = vpop.f32.mrb[0].mxu0
    %168 = vmatprep.mubr.f32.mxu0 0.0
    %169 = vmatmul.mubr.f32.gmra.mrb[0].mxu0 %v68
    %v170 = vpop.f32.mrb[0].mxu0
    %v171 = vadd.f32 0.0, %v170
    %v172 = vpop.f32.mrb[0].mxu0
    %173 = vmatprep.mubr.f32.mxu0 0.0
    %174 = vmatmul.mubr.f32.gmra.mrb[0].mxu0 %v71
    %v175 = vpop.f32.mrb[0].mxu0
    %v176 = vadd.f32 0.0, %v175
    %v177 = vpop.f32.mrb[0].mxu0
    %178 = vmatprep.mubr.f32.mxu0 0.0
    %179 = vmatmul.mubr.f32.gmra.mrb[0].mxu0 %v74
    %v180 = vpop.f32.mrb[0].mxu0
    %v181 = vadd.f32 0.0, %v180
    %v182 = vpop.f32.mrb[0].mxu0
    %183 = vdwg.mxu0
    %v184 = vld [vmem:[%s1] sm:$0xff]
    %v185 = vld [vmem:[%s1 + $0x8] sm:$0xff]
    %v186 = vld [vmem:[%s1 + $0x10] sm:$0xff]
    %v187 = vld [vmem:[%s1 + $0x18] sm:$0xff]
    %v188 = vld [vmem:[%s1 + $0x20] sm:$0xff]
    %v189 = vld [vmem:[%s1 + $0x28] sm:$0xff]
    %v190 = vld [vmem:[%s1 + $0x30] sm:$0xff]
    %v191 = vld [vmem:[%s1 + $0x38] sm:$0xff]
    %v192 = vld [vmem:[%s5] sm:$0xff]
    %v194 = vsel %vm51, %v184, 0
    %v197 = vsel %vm51, %v185, 0
    %v200 = vsel %vm51, %v186, 0
    %v203 = vsel %vm51, %v187, 0
    %v206 = vsel %vm51, %v188, 0
    %v209 = vsel %vm51, %v189, 0
    %v212 = vsel %vm51, %v190, 0
    %v215 = vsel %vm51, %v191, 0
    %v218 = vsel %vm51, %v192, 0
    %220 = vmatprep.subr.mxu0 0.0
    %221 = vmatpush1.xpose.msra.mxu0 %v218
    %222 = vmatprep.subr.mxu0 0.0
    %223 = vmatpush1.xpose.msra.mxu0 0.0
    %224 = vmatprep.subr.mxu0 0.0
    %225 = vmatpush1.xpose.msra.mxu0 0.0
    %226 = vmatprep.subr.mxu0 0.0
    %227 = vmatpush1.xpose.msra.mxu0 0.0
    %228 = vmatprep.subr.mxu0 0.0
    %229 = vmatpush1.xpose.msra.mxu0 0.0
    %230 = vmatprep.subr.mxu0 0.0
    %231 = vmatpush1.xpose.msra.mxu0 0.0
    %232 = vmatprep.subr.mxu0 0.0
    %233 = vmatpush1.xpose.msra.mxu0 0.0
    %234 = vmatprep.subr.mxu0 0.0
    %235 = vmatpush1.xpose.msra.mxu0 0.0
    %236 = vmatprep.subr.mxu0 0.0
    %237 = vmatpush1.xpose.msra.mxu0 0.0
    %238 = vmatprep.subr.mxu0 0.0
    %239 = vmatpush1.xpose.msra.mxu0 0.0
    %240 = vmatprep.subr.mxu0 0.0
    %241 = vmatpush1.xpose.msra.mxu0 0.0
    %242 = vmatprep.subr.mxu0 0.0
    %243 = vmatpush1.xpose.msra.mxu0 0.0
    %244 = vmatprep.subr.mxu0 0.0
    %245 = vmatpush1.xpose.msra.mxu0 0.0
    %246 = vmatprep.subr.mxu0 0.0
    %247 = vmatpush1.xpose.msra.mxu0 0.0
    %248 = vmatprep.subr.mxu0 0.0
    %249 = vmatpush1.xpose.msra.mxu0 0.0
    %250 = vmatprep.subr.mxu0 0.0
    %251 = vmatpush1.xpose.msra.mxu0 0.0
    %252 = vmatprep.subr.mxu0 0.0
    %253 = vmatpush1.xpose.msra.mxu0 0.0
    %254 = vmatprep.subr.mxu0 0.0
    %255 = vmatpush1.xpose.msra.mxu0 0.0
    %256 = vmatprep.subr.mxu0 0.0
    %257 = vmatpush1.xpose.msra.mxu0 0.0
    %258 = vmatprep.subr.mxu0 0.0
    %259 = vmatpush1.xpose.msra.mxu0 0.0
    %260 = vmatprep.subr.mxu0 0.0
    %261 = vmatpush1.xpose.msra.mxu0 0.0
    %262 = vmatprep.subr.mxu0 0.0
    %263 = vmatpush1.xpose.msra.mxu0 0.0
    %264 = vmatprep.subr.mxu0 0.0
    %265 = vmatpush1.xpose.msra.mxu0 0.0
    %266 = vmatprep.subr.mxu0 0.0
    %267 = vmatpush1.xpose.msra.mxu0 0.0
    %268 = vmatprep.subr.mxu0 0.0
    %269 = vmatpush1.xpose.msra.mxu0 0.0
    %270 = vmatprep.subr.mxu0 0.0
    %271 = vmatpush1.xpose.msra.mxu0 0.0
    %272 = vmatprep.subr.mxu0 0.0
    %273 = vmatpush1.xpose.msra.mxu0 0.0
    %274 = vmatprep.subr.mxu0 0.0
    %275 = vmatpush1.xpose.msra.mxu0 0.0
    %276 = vmatprep.subr.mxu0 0.0
    %277 = vmatpush1.xpose.msra.mxu0 0.0
    %278 = vmatprep.subr.mxu0 0.0
    %279 = vmatpush1.xpose.msra.mxu0 0.0
    %280 = vmatprep.subr.mxu0 0.0
    %281 = vmatpush1.xpose.msra.mxu0 0.0
    %282 = vmatprep.subr.mxu0 0.0
    %283 = vmatpush1.xpose.msra.mxu0 0.0
    %284 = vmatprep.mubr.f32.mxu0 0.0
    %285 = vmatmul.mubr.f32.gmra.mrb[0].mxu0 %v194
    %v286 = vpop.f32.mrb[0].mxu0
    %v287 = vadd.f32 0.0, %v286
    %v288 = vpop.f32.mrb[0].mxu0
    %289 = vmatprep.mubr.f32.mxu0 0.0
    %290 = vmatmul.mubr.f32.gmra.mrb[0].mxu0 %v197
    %v291 = vpop.f32.mrb[0].mxu0
    %v292 = vadd.f32 0.0, %v291
    %v293 = vpop.f32.mrb[0].mxu0
    %294 = vmatprep.mubr.f32.mxu0 0.0
    %295 = vmatmul.mubr.f32.gmra.mrb[0].mxu0 %v200
    %v296 = vpop.f32.mrb[0].mxu0
    %v297 = vadd.f32 0.0, %v296
    %v298 = vpop.f32.mrb[0].mxu0
    %299 = vmatprep.mubr.f32.mxu0 0.0
    %300 = vmatmul.mubr.f32.gmra.mrb[0].mxu0 %v203
    %v301 = vpop.f32.mrb[0].mxu0
    %v302 = vadd.f32 0.0, %v301
    %v303 = vpop.f32.mrb[0].mxu0
    %304 = vmatprep.mubr.f32.mxu0 0.0
    %305 = vmatmul.mubr.f32.gmra.mrb[0].mxu0 %v206
    %v306 = vpop.f32.mrb[0].mxu0
    %v307 = vadd.f32 0.0, %v306
    %v308 = vpop.f32.mrb[0].mxu0
    %309 = vmatprep.mubr.f32.mxu0 0.0
    %310 = vmatmul.mubr.f32.gmra.mrb[0].mxu0 %v209
    %v311 = vpop.f32.mrb[0].mxu0
    %v312 = vadd.f32 0.0, %v311
    %v313 = vpop.f32.mrb[0].mxu0
    %314 = vmatprep.mubr.f32.mxu0 0.0
    %315 = vmatmul.mubr.f32.gmra.mrb[0].mxu0 %v212
    %v316 = vpop.f32.mrb[0].mxu0
    %v317 = vadd.f32 0.0, %v316
    %v318 = vpop.f32.mrb[0].mxu0
    %319 = vmatprep.mubr.f32.mxu0 0.0
    %320 = vmatmul.mubr.f32.gmra.mrb[0].mxu0 %v215
    %v321 = vpop.f32.mrb[0].mxu0
    %v322 = vadd.f32 0.0, %v321
    %v323 = vpop.f32.mrb[0].mxu0
    %324 = vdwg.mxu0
    %v325 = vld [vmem:[%s2] sm:$0xff]
    %v326 = vld [vmem:[%s2 + $0x8] sm:$0xff]
    %v327 = vld [vmem:[%s6] sm:$0xff]
    %v328 = vld [vmem:[%s6 + $0x8] sm:$0xff]
    %v329 = vld [vmem:[%s6 + $0x10] sm:$0xff]
    %v330 = vld [vmem:[%s6 + $0x18] sm:$0xff]
    %vm331 = vcmask 261120
    %v333 = vsel %vm331, %v325, 0
    %v336 = vsel %vm331, %v326, 0
    %v339 = vsel %vm331, %v327, 0
    %v342 = vsel %vm331, %v328, 0
    %v345 = vsel %vm331, %v329, 0
    %v348 = vsel %vm331, %v330, 0
    %350 = vmatprep.subr.mxu0 0.0
    %351 = vmatpush1.xpose.msra.mxu0 %v339
    %352 = vmatprep.subr.mxu0 0.0
    %353 = vmatpush1.xpose.msra.mxu0 %v342
    %354 = vmatprep.subr.mxu0 0.0
    %355 = vmatpush1.xpose.msra.mxu0 %v345
    %356 = vmatprep.subr.mxu0 0.0
    %357 = vmatpush1.xpose.msra.mxu0 %v348
    %358 = vmatprep.subr.mxu0 0.0
    %359 = vmatpush1.xpose.msra.mxu0 0.0
    %360 = vmatprep.subr.mxu0 0.0
    %361 = vmatpush1.xpose.msra.mxu0 0.0
    %362 = vmatprep.subr.mxu0 0.0
    %363 = vmatpush1.xpose.msra.mxu0 0.0
    %364 = vmatprep.subr.mxu0 0.0
    %365 = vmatpush1.xpose.msra.mxu0 0.0
    %366 = vmatprep.subr.mxu0 0.0
    %367 = vmatpush1.xpose.msra.mxu0 0.0
    %368 = vmatprep.subr.mxu0 0.0
    %369 = vmatpush1.xpose.msra.mxu0 0.0
    %370 = vmatprep.subr.mxu0 0.0
    %371 = vmatpush1.xpose.msra.mxu0 0.0
    %372 = vmatprep.subr.mxu0 0.0
    %373 = vmatpush1.xpose.msra.mxu0 0.0
    %374 = vmatprep.subr.mxu0 0.0
    %375 = vmatpush1.xpose.msra.mxu0 0.0
    %376 = vmatprep.subr.mxu0 0.0
    %377 = vmatpush1.xpose.msra.mxu0 0.0
    %378 = vmatprep.subr.mxu0 0.0
    %379 = vmatpush1.xpose.msra.mxu0 0.0
    %380 = vmatprep.subr.mxu0 0.0
    %381 = vmatpush1.xpose.msra.mxu0 0.0
    %382 = vmatprep.subr.mxu0 0.0
    %383 = vmatpush1.xpose.msra.mxu0 0.0
    %384 = vmatprep.subr.mxu0 0.0
    %385 = vmatpush1.xpose.msra.mxu0 0.0
    %386 = vmatprep.subr.mxu0 0.0
    %387 = vmatpush1.xpose.msra.mxu0 0.0
    %388 = vmatprep.subr.mxu0 0.0
    %389 = vmatpush1.xpose.msra.mxu0 0.0
    %390 = vmatprep.subr.mxu0 0.0
    %391 = vmatpush1.xpose.msra.mxu0 0.0
    %392 = vmatprep.subr.mxu0 0.0
    %393 = vmatpush1.xpose.msra.mxu0 0.0
    %394 = vmatprep.subr.mxu0 0.0
    %395 = vmatpush1.xpose.msra.mxu0 0.0
    %396 = vmatprep.subr.mxu0 0.0
    %397 = vmatpush1.xpose.msra.mxu0 0.0
    %398 = vmatprep.subr.mxu0 0.0
    %399 = vmatpush1.xpose.msra.mxu0 0.0
    %400 = vmatprep.subr.mxu0 0.0
    %401 = vmatpush1.xpose.msra.mxu0 0.0
    %402 = vmatprep.subr.mxu0 0.0
    %403 = vmatpush1.xpose.msra.mxu0 0.0
    %404 = vmatprep.subr.mxu0 0.0
    %405 = vmatpush1.xpose.msra.mxu0 0.0
    %406 = vmatprep.subr.mxu0 0.0
    %407 = vmatpush1.xpose.msra.mxu0 0.0
    %408 = vmatprep.subr.mxu0 0.0
    %409 = vmatpush1.xpose.msra.mxu0 0.0
    %410 = vmatprep.subr.mxu0 0.0
    %411 = vmatpush1.xpose.msra.mxu0 0.0
    %412 = vmatprep.subr.mxu0 0.0
    %413 = vmatpush1.xpose.msra.mxu0 0.0
    %414 = vmatprep.mubr.f32.mxu0 0.0
    %415 = vmatmul.mubr.f32.gmra.mrb[0].mxu0 %v333
    %v416 = vpop.f32.mrb[0].mxu0
    %v417 = vadd.f32 0.0, %v416
    %v418 = vpop.f32.mrb[0].mxu0
    %419 = vmatprep.mubr.f32.mxu0 0.0
    %420 = vmatmul.mubr.f32.gmra.mrb[0].mxu0 %v336
    %v421 = vpop.f32.mrb[0].mxu0
    %v422 = vadd.f32 0.0, %v421
    %v423 = vpop.f32.mrb[0].mxu0
    %424 = vdwg.mxu0
    %v426 = vsel %vm51, %v146, 0
    %v429 = vsel %vm51, %v151, 0
    %v432 = vsel %vm51, %v156, 0
    %v435 = vsel %vm51, %v161, 0
    %v438 = vsel %vm51, %v166, 0
    %v441 = vsel %vm51, %v171, 0
    %v444 = vsel %vm51, %v176, 0
    %v447 = vsel %vm51, %v181, 0
    %v450 = vsel %vm51, %v287, 0
    %v453 = vsel %vm51, %v292, 0
    %v456 = vsel %vm51, %v297, 0
    %v459 = vsel %vm51, %v302, 0
    %v462 = vsel %vm51, %v307, 0
    %v465 = vsel %vm51, %v312, 0
    %v468 = vsel %vm51, %v317, 0
    %v471 = vsel %vm51, %v322, 0
    %473 = vmatprep.subr.mxu0 0.0
    %474 = vmatpush1.xpose.msra.mxu0 %v450
    %475 = vmatprep.subr.mxu0 0.0
    %476 = vmatpush1.xpose.msra.mxu0 %v453
    %477 = vmatprep.subr.mxu0 0.0
    %478 = vmatpush1.xpose.msra.mxu0 %v456
    %479 = vmatprep.subr.mxu0 0.0
    %480 = vmatpush1.xpose.msra.mxu0 %v459
    %481 = vmatprep.subr.mxu0 0.0
    %482 = vmatpush1.xpose.msra.mxu0 %v462
    %483 = vmatprep.subr.mxu0 0.0
    %484 = vmatpush1.xpose.msra.mxu0 %v465
    %485 = vmatprep.subr.mxu0 0.0
    %486 = vmatpush1.xpose.msra.mxu0 %v468
    %487 = vmatprep.subr.mxu0 0.0
    %488 = vmatpush1.xpose.msra.mxu0 %v471
    %489 = vmatprep.subr.mxu0 0.0
    %490 = vmatpush1.xpose.msra.mxu0 0.0
    %491 = vmatprep.subr.mxu0 0.0
    %492 = vmatpush1.xpose.msra.mxu0 0.0
    %493 = vmatprep.subr.mxu0 0.0
    %494 = vmatpush1.xpose.msra.mxu0 0.0
    %495 = vmatprep.subr.mxu0 0.0
    %496 = vmatpush1.xpose.msra.mxu0 0.0
    %497 = vmatprep.subr.mxu0 0.0
    %498 = vmatpush1.xpose.msra.mxu0 0.0
    %499 = vmatprep.subr.mxu0 0.0
    %500 = vmatpush1.xpose.msra.mxu0 0.0
    %501 = vmatprep.subr.mxu0 0.0
    %502 = vmatpush1.xpose.msra.mxu0 0.0
    %503 = vmatprep.subr.mxu0 0.0
    %504 = vmatpush1.xpose.msra.mxu0 0.0
    %505 = vmatprep.subr.mxu0 0.0
    %506 = vmatpush1.xpose.msra.mxu0 0.0
    %507 = vmatprep.subr.mxu0 0.0
    %508 = vmatpush1.xpose.msra.mxu0 0.0
    %509 = vmatprep.subr.mxu0 0.0
    %510 = vmatpush1.xpose.msra.mxu0 0.0
    %511 = vmatprep.subr.mxu0 0.0
    %512 = vmatpush1.xpose.msra.mxu0 0.0
    %513 = vmatprep.subr.mxu0 0.0
    %514 = vmatpush1.xpose.msra.mxu0 0.0
    %515 = vmatprep.subr.mxu0 0.0
    %516 = vmatpush1.xpose.msra.mxu0 0.0
    %517 = vmatprep.subr.mxu0 0.0
    %518 = vmatpush1.xpose.msra.mxu0 0.0
    %519 = vmatprep.subr.mxu0 0.0
    %520 = vmatpush1.xpose.msra.mxu0 0.0
    %521 = vmatprep.subr.mxu0 0.0
    %522 = vmatpush1.xpose.msra.mxu0 0.0
    %523 = vmatprep.subr.mxu0 0.0
    %524 = vmatpush1.xpose.msra.mxu0 0.0
    %525 = vmatprep.subr.mxu0 0.0
    %526 = vmatpush1.xpose.msra.mxu0 0.0
    %527 = vmatprep.subr.mxu0 0.0
    %528 = vmatpush1.xpose.msra.mxu0 0.0
    %529 = vmatprep.subr.mxu0 0.0
    %530 = vmatpush1.xpose.msra.mxu0 0.0
    %531 = vmatprep.subr.mxu0 0.0
    %532 = vmatpush1.xpose.msra.mxu0 0.0
    %533 = vmatprep.subr.mxu0 0.0
    %534 = vmatpush1.xpose.msra.mxu0 0.0
    %535 = vmatprep.subr.mxu0 0.0
    %536 = vmatpush1.xpose.msra.mxu0 0.0
    %537 = vmatprep.mubr.f32.mxu0 0.0
    %538 = vmatmul.mubr.f32.gmra.mrb[0].mxu0 %v426
    %v539 = vpop.f32.mrb[0].mxu0
    %v540 = vadd.f32 0.0, %v539
    %v541 = vpop.f32.mrb[0].mxu0
    %542 = vmatprep.mubr.f32.mxu0 0.0
    %543 = vmatmul.mubr.f32.gmra.mrb[0].mxu0 %v429
    %v544 = vpop.f32.mrb[0].mxu0
    %v545 = vadd.f32 0.0, %v544
    %v546 = vpop.f32.mrb[0].mxu0
    %547 = vmatprep.mubr.f32.mxu0 0.0
    %548 = vmatmul.mubr.f32.gmra.mrb[0].mxu0 %v432
    %v549 = vpop.f32.mrb[0].mxu0
    %v550 = vadd.f32 0.0, %v549
    %v551 = vpop.f32.mrb[0].mxu0
    %552 = vmatprep.mubr.f32.mxu0 0.0
    %553 = vmatmul.mubr.f32.gmra.mrb[0].mxu0 %v435
    %v554 = vpop.f32.mrb[0].mxu0
    %v555 = vadd.f32 0.0, %v554
    %v556 = vpop.f32.mrb[0].mxu0
    %557 = vmatprep.mubr.f32.mxu0 0.0
    %558 = vmatmul.mubr.f32.gmra.mrb[0].mxu0 %v438
    %v559 = vpop.f32.mrb[0].mxu0
    %v560 = vadd.f32 0.0, %v559
    %v561 = vpop.f32.mrb[0].mxu0
    %562 = vmatprep.mubr.f32.mxu0 0.0
    %563 = vmatmul.mubr.f32.gmra.mrb[0].mxu0 %v441
    %v564 = vpop.f32.mrb[0].mxu0
    %v565 = vadd.f32 0.0, %v564
    %v566 = vpop.f32.mrb[0].mxu0
    %567 = vmatprep.mubr.f32.mxu0 0.0
    %568 = vmatmul.mubr.f32.gmra.mrb[0].mxu0 %v444
    %v569 = vpop.f32.mrb[0].mxu0
    %v570 = vadd.f32 0.0, %v569
    %v571 = vpop.f32.mrb[0].mxu0
    %572 = vmatprep.mubr.f32.mxu0 0.0
    %573 = vmatmul.mubr.f32.gmra.mrb[0].mxu0 %v447
    %v574 = vpop.f32.mrb[0].mxu0
    %v575 = vadd.f32 0.0, %v574
    %v576 = vpop.f32.mrb[0].mxu0
    %577 = vdwg.mxu0
    %v578 = vld [vmem:[%s3] sm:$0xff]
    %v579 = vld [vmem:[%s3 + $0x8] sm:$0xff]
    %v580 = vld [vmem:[%s3 + $0x10] sm:$0xff]
    %v581 = vld [vmem:[%s3 + $0x18] sm:$0xff]
    %v582 = vld [vmem:[%s3 + $0x20] sm:$0xff]
    %v583 = vld [vmem:[%s3 + $0x28] sm:$0xff]
    %v584 = vld [vmem:[%s3 + $0x30] sm:$0xff]
    %v585 = vld [vmem:[%s3 + $0x38] sm:$0xff]
    %vm586 = vcmp.eq.f32.partialorder %v578, 0.0
    %vm587 = vcmp.eq.f32.partialorder %v579, 0.0
    %vm588 = vcmp.eq.f32.partialorder %v580, 0.0
    %vm589 = vcmp.eq.f32.partialorder %v581, 0.0
    %vm590 = vcmp.eq.f32.partialorder %v582, 0.0
    %vm591 = vcmp.eq.f32.partialorder %v583, 0.0
    %vm592 = vcmp.eq.f32.partialorder %v584, 0.0
    %vm593 = vcmp.eq.f32.partialorder %v585, 0.0
    %v594 = vsel %vm586, -1e+20, %v540
    %v595 = vsel %vm587, -1e+20, %v545
    %v596 = vsel %vm588, -1e+20, %v550
    %v597 = vsel %vm589, -1e+20, %v555
    %v598 = vsel %vm590, -1e+20, %v560
    %v599 = vsel %vm591, -1e+20, %v565
    %v600 = vsel %vm592, -1e+20, %v570
    %v601 = vsel %vm593, -1e+20, %v575
    %v602 = vmul.f32 %v594, 0.17677669
    %v603 = vmul.f32 %v595, 0.17677669
    %v604 = vmul.f32 %v596, 0.17677669
    %v605 = vmul.f32 %v597, 0.17677669
    %v606 = vmul.f32 %v598, 0.17677669
    %v607 = vmul.f32 %v599, 0.17677669
    %v608 = vmul.f32 %v600, 0.17677669
    %v609 = vmul.f32 %v601, 0.17677669
    %vm610 = vcmask 523264
    %v611 = vsel %vm610, %v602, -inf
    %612 = vmax.xlane.f32.xlu0 %v611
    %v613 = vpop.xlane.xlu0 %612
    %v614 = vsel %vm610, %v603, -inf
    %615 = vmax.xlane.f32.xlu0 %v614
    %v616 = vpop.xlane.xlu0 %615
    %v617 = vsel %vm610, %v604, -inf
    %618 = vmax.xlane.f32.xlu0 %v617
    %v619 = vpop.xlane.xlu0 %618
    %v620 = vsel %vm610, %v605, -inf
    %621 = vmax.xlane.f32.xlu0 %v620
    %v622 = vpop.xlane.xlu0 %621
    %v623 = vsel %vm610, %v606, -inf
    %624 = vmax.xlane.f32.xlu0 %v623
    %v625 = vpop.xlane.xlu0 %624
    %v626 = vsel %vm610, %v607, -inf
    %627 = vmax.xlane.f32.xlu0 %v626
    %v628 = vpop.xlane.xlu0 %627
    %v629 = vsel %vm610, %v608, -inf
    %630 = vmax.xlane.f32.xlu0 %v629
    %v631 = vpop.xlane.xlu0 %630
    %v632 = vsel %vm610, %v609, -inf
    %633 = vmax.xlane.f32.xlu0 %v632
    %v634 = vpop.xlane.xlu0 %633
    %v635 = vsub.f32 %v602, %v613
    %v636 = vsub.f32 %v603, %v616
    %v637 = vsub.f32 %v604, %v619
    %v638 = vsub.f32 %v605, %v622
    %v639 = vsub.f32 %v606, %v625
    %v640 = vsub.f32 %v607, %v628
    %v641 = vsub.f32 %v608, %v631
    %v642 = vsub.f32 %v609, %v634
    %v643 = vmul.f32 %v635, 1.442695
    %v644 = vpow.pop %v643
    %v645 = vmul.f32 %v636, 1.442695
    %v646 = vpow.pop %v645
    %v647 = vmul.f32 %v637, 1.442695
    %v648 = vpow.pop %v647
    %v649 = vmul.f32 %v638, 1.442695
    %v650 = vpow.pop %v649
    %v651 = vmul.f32 %v639, 1.442695
    %v652 = vpow.pop %v651
    %v653 = vmul.f32 %v640, 1.442695
    %v654 = vpow.pop %v653
    %v655 = vmul.f32 %v641, 1.442695
    %v656 = vpow.pop %v655
    %v657 = vmul.f32 %v642, 1.442695
    %v658 = vpow.pop %v657
    %v659 = vsel %vm610, %v644, 0.0
    %660 = vadd.xlane.f32.xlu0 %v659
    %v661 = vpop.xlane.xlu0 %660
    %v662 = vsel %vm610, %v646, 0.0
    %663 = vadd.xlane.f32.xlu0 %v662
    %v664 = vpop.xlane.xlu0 %663
    %v665 = vsel %vm610, %v648, 0.0
    %666 = vadd.xlane.f32.xlu0 %v665
    %v667 = vpop.xlane.xlu0 %666
    %v668 = vsel %vm610, %v650, 0.0
    %669 = vadd.xlane.f32.xlu0 %v668
    %v670 = vpop.xlane.xlu0 %669
    %v671 = vsel %vm610, %v652, 0.0
    %672 = vadd.xlane.f32.xlu0 %v671
    %v673 = vpop.xlane.xlu0 %672
    %v674 = vsel %vm610, %v654, 0.0
    %675 = vadd.xlane.f32.xlu0 %v674
    %v676 = vpop.xlane.xlu0 %675
    %v677 = vsel %vm610, %v656, 0.0
    %678 = vadd.xlane.f32.xlu0 %v677
    %v679 = vpop.xlane.xlu0 %678
    %v680 = vsel %vm610, %v658, 0.0
    %681 = vadd.xlane.f32.xlu0 %v680
    %v682 = vpop.xlane.xlu0 %681
    %v683 = vrcp.pop %v661
    %v684 = vmul.f32 %v644, %v683
    %v685 = vrcp.pop %v664
    %v686 = vmul.f32 %v646, %v685
    %v687 = vrcp.pop %v667
    %v688 = vmul.f32 %v648, %v687
    %v689 = vrcp.pop %v670
    %v690 = vmul.f32 %v650, %v689
    %v691 = vrcp.pop %v673
    %v692 = vmul.f32 %v652, %v691
    %v693 = vrcp.pop %v676
    %v694 = vmul.f32 %v654, %v693
    %v695 = vrcp.pop %v679
    %v696 = vmul.f32 %v656, %v695
    %v697 = vrcp.pop %v682
    %v698 = vmul.f32 %v658, %v697
    %v699 = vsel %vm610, %v684, 0.0
    %700 = vadd.xlane.f32.xlu0 %v699
    %v701 = vpop.xlane.xlu0 %700
    %v702 = vsel %vm610, %v686, 0.0
    %703 = vadd.xlane.f32.xlu0 %v702
    %v704 = vpop.xlane.xlu0 %703
    %v705 = vsel %vm610, %v688, 0.0
    %706 = vadd.xlane.f32.xlu0 %v705
    %v707 = vpop.xlane.xlu0 %706
    %v708 = vsel %vm610, %v690, 0.0
    %709 = vadd.xlane.f32.xlu0 %v708
    %v710 = vpop.xlane.xlu0 %709
    %v711 = vsel %vm610, %v692, 0.0
    %712 = vadd.xlane.f32.xlu0 %v711
    %v713 = vpop.xlane.xlu0 %712
    %v714 = vsel %vm610, %v694, 0.0
    %715 = vadd.xlane.f32.xlu0 %v714
    %v716 = vpop.xlane.xlu0 %715
    %v717 = vsel %vm610, %v696, 0.0
    %718 = vadd.xlane.f32.xlu0 %v717
    %v719 = vpop.xlane.xlu0 %718
    %v720 = vsel %vm610, %v698, 0.0
    %721 = vadd.xlane.f32.xlu0 %v720
    %v722 = vpop.xlane.xlu0 %721
    %v723 = vld [vmem:[%s10] sm:$0xff]
    %v724 = vld [vmem:[%s10 + $0x8] sm:$0xff]
    %v725 = vld [vmem:[%s9] sm:$0xff]
    %v726 = vld [vmem:[%s9 + $0x8] sm:$0xff]
    %v727 = vld [vmem:[%s9 + $0x10] sm:$0xff]
    %v728 = vld [vmem:[%s9 + $0x18] sm:$0xff]
    %v729 = vld [vmem:[%s9 + $0x20] sm:$0xff]
    %v730 = vld [vmem:[%s9 + $0x28] sm:$0xff]
    %v731 = vld [vmem:[%s9 + $0x30] sm:$0xff]
    %v732 = vld [vmem:[%s9 + $0x38] sm:$0xff]
    %v733 = vmul.f32 %v701, %v725
    %v734 = vmul.f32 %v704, %v726
    %v735 = vmul.f32 %v707, %v727
    %v736 = vmul.f32 %v710, %v728
    %v737 = vmul.f32 %v713, %v729
    %v738 = vmul.f32 %v716, %v730
    %v739 = vmul.f32 %v719, %v731
    %v740 = vmul.f32 %v722, %v732
    %v742 = vsel %vm610, %v723, 0
    %v745 = vsel %vm610, %v724, 0
    %747 = vmatprep.subr.mxu0 0.0
    %748 = vmatpush1.msra.mxu0 %v733
    %749 = vmatprep.subr.mxu0 0.0
    %750 = vmatpush1.msra.mxu0 %v734
    %751 = vmatprep.subr.mxu0 0.0
    %752 = vmatpush1.msra.mxu0 %v735
    %753 = vmatprep.subr.mxu0 0.0
    %754 = vmatpush1.msra.mxu0 %v736
    %755 = vmatprep.subr.mxu0 0.0
    %756 = vmatpush1.msra.mxu0 %v737
    %757 = vmatprep.subr.mxu0 0.0
    %758 = vmatpush1.msra.mxu0 %v738
    %759 = vmatprep.subr.mxu0 0.0
    %760 = vmatpush1.msra.mxu0 %v739
    %761 = vmatprep.subr.mxu0 0.0
    %762 = vmatpush1.msra.mxu0 %v740
    %763 = vmatprep.subr.mxu0 0.0
    %764 = vmatpush1.msra.mxu0 0.0
    %765 = vmatprep.subr.mxu0 0.0
    %766 = vmatpush1.msra.mxu0 0.0
    %767 = vmatprep.subr.mxu0 0.0
    %768 = vmatpush1.msra.mxu0 0.0
    %769 = vmatprep.subr.mxu0 0.0
    %770 = vmatpush1.msra.mxu0 0.0
    %771 = vmatprep.subr.mxu0 0.0
    %772 = vmatpush1.msra.mxu0 0.0
    %773 = vmatprep.subr.mxu0 0.0
    %774 = vmatpush1.msra.mxu0 0.0
    %775 = vmatprep.subr.mxu0 0.0
    %776 = vmatpush1.msra.mxu0 0.0
    %777 = vmatprep.subr.mxu0 0.0
    %778 = vmatpush1.msra.mxu0 0.0
    %779 = vmatprep.subr.mxu0 0.0
    %780 = vmatpush1.msra.mxu0 0.0
    %781 = vmatprep.subr.mxu0 0.0
    %782 = vmatpush1.msra.mxu0 0.0
    %783 = vmatprep.subr.mxu0 0.0
    %784 = vmatpush1.msra.mxu0 0.0
    %785 = vmatprep.subr.mxu0 0.0
    %786 = vmatpush1.msra.mxu0 0.0
    %787 = vmatprep.subr.mxu0 0.0
    %788 = vmatpush1.msra.mxu0 0.0
    %789 = vmatprep.subr.mxu0 0.0
    %790 = vmatpush1.msra.mxu0 0.0
    %791 = vmatprep.subr.mxu0 0.0
    %792 = vmatpush1.msra.mxu0 0.0
    %793 = vmatprep.subr.mxu0 0.0
    %794 = vmatpush1.msra.mxu0 0.0
    %795 = vmatprep.subr.mxu0 0.0
    %796 = vmatpush1.msra.mxu0 0.0
    %797 = vmatprep.subr.mxu0 0.0
    %798 = vmatpush1.msra.mxu0 0.0
    %799 = vmatprep.subr.mxu0 0.0
    %800 = vmatpush1.msra.mxu0 0.0
    %801 = vmatprep.subr.mxu0 0.0
    %802 = vmatpush1.msra.mxu0 0.0
    %803 = vmatprep.subr.mxu0 0.0
    %804 = vmatpush1.msra.mxu0 0.0
    %805 = vmatprep.subr.mxu0 0.0
    %806 = vmatpush1.msra.mxu0 0.0
    %807 = vmatprep.subr.mxu0 0.0
    %808 = vmatpush1.msra.mxu0 0.0
    %809 = vmatprep.subr.mxu0 0.0
    %810 = vmatpush1.msra.mxu0 0.0
    %811 = vmatprep.mubr.f32.mxu0 0.0
    %812 = vmatmul.mubr.f32.gmra.mrb[0].mxu0 %v742
    %v813 = vpop.f32.mrb[0].mxu0
    %v814 = vadd.f32 0.0, %v813
    %v815 = vpop.f32.mrb[0].mxu0
    %816 = vmatprep.mubr.f32.mxu0 0.0
    %817 = vmatmul.mubr.f32.gmra.mrb[0].mxu0 %v745
    %v818 = vpop.f32.mrb[0].mxu0
    %v819 = vadd.f32 0.0, %v818
    %v820 = vpop.f32.mrb[0].mxu0
    %821 = vdwg.mxu0
    %v822 = vld [vmem:[%s11] sm:$0xff]
    %v823 = vld [vmem:[%s11 + $0x8] sm:$0xff]
    %vm824 = vcmask 130048
    %v826 = vsel %vm824, %v822, 0
    %v829 = vsel %vm824, %v823, 0
    %831 = vmatprep.subr.mxu0 0.0
    %832 = vmatpush1.msra.mxu0 %v417
    %833 = vmatprep.subr.mxu0 0.0
    %834 = vmatpush1.msra.mxu0 %v422
    %835 = vmatprep.subr.mxu0 0.0
    %836 = vmatpush1.msra.mxu0 0.0
    %837 = vmatprep.subr.mxu0 0.0
    %838 = vmatpush1.msra.mxu0 0.0
    %839 = vmatprep.subr.mxu0 0.0
    %840 = vmatpush1.msra.mxu0 0.0
    %841 = vmatprep.subr.mxu0 0.0
    %842 = vmatpush1.msra.mxu0 0.0
    %843 = vmatprep.subr.mxu0 0.0
    %844 = vmatpush1.msra.mxu0 0.0
    %845 = vmatprep.subr.mxu0 0.0
    %846 = vmatpush1.msra.mxu0 0.0
    %847 = vmatprep.subr.mxu0 0.0
    %848 = vmatpush1.msra.mxu0 0.0
    %849 = vmatprep.subr.mxu0 0.0
    %850 = vmatpush1.msra.mxu0 0.0
    %851 = vmatprep.subr.mxu0 0.0
    %852 = vmatpush1.msra.mxu0 0.0
    %853 = vmatprep.subr.mxu0 0.0
    %854 = vmatpush1.msra.mxu0 0.0
    %855 = vmatprep.subr.mxu0 0.0
    %856 = vmatpush1.msra.mxu0 0.0
    %857 = vmatprep.subr.mxu0 0.0
    %858 = vmatpush1.msra.mxu0 0.0
    %859 = vmatprep.subr.mxu0 0.0
    %860 = vmatpush1.msra.mxu0 0.0
    %861 = vmatprep.subr.mxu0 0.0
    %862 = vmatpush1.msra.mxu0 0.0
    %863 = vmatprep.subr.mxu0 0.0
    %864 = vmatpush1.msra.mxu0 0.0
    %865 = vmatprep.subr.mxu0 0.0
    %866 = vmatpush1.msra.mxu0 0.0
    %867 = vmatprep.subr.mxu0 0.0
    %868 = vmatpush1.msra.mxu0 0.0
    %869 = vmatprep.subr.mxu0 0.0
    %870 = vmatpush1.msra.mxu0 0.0
    %871 = vmatprep.subr.mxu0 0.0
    %872 = vmatpush1.msra.mxu0 0.0
    %873 = vmatprep.subr.mxu0 0.0
    %874 = vmatpush1.msra.mxu0 0.0
    %875 = vmatprep.subr.mxu0 0.0
    %876 = vmatpush1.msra.mxu0 0.0
    %877 = vmatprep.subr.mxu0 0.0
    %878 = vmatpush1.msra.mxu0 0.0
    %879 = vmatprep.subr.mxu0 0.0
    %880 = vmatpush1.msra.mxu0 0.0
    %881 = vmatprep.subr.mxu0 0.0
    %882 = vmatpush1.msra.mxu0 0.0
    %883 = vmatprep.subr.mxu0 0.0
    %884 = vmatpush1.msra.mxu0 0.0
    %885 = vmatprep.subr.mxu0 0.0
    %886 = vmatpush1.msra.mxu0 0.0
    %887 = vmatprep.subr.mxu0 0.0
    %888 = vmatpush1.msra.mxu0 0.0
    %889 = vmatprep.subr.mxu0 0.0
    %890 = vmatpush1.msra.mxu0 0.0
    %891 = vmatprep.subr.mxu0 0.0
    %892 = vmatpush1.msra.mxu0 0.0
    %893 = vmatprep.subr.mxu0 0.0
    %894 = vmatpush1.msra.mxu0 0.0
    %895 = vmatprep.mubr.f32.mxu0 0.0
    %896 = vmatmul.mubr.f32.gmra.mrb[0].mxu0 %v826
    %v897 = vpop.f32.mrb[0].mxu0
    %v898 = vadd.f32 0.0, %v897
    %v899 = vpop.f32.mrb[0].mxu0
    %900 = vmatprep.mubr.f32.mxu0 0.0
    %901 = vmatmul.mubr.f32.gmra.mrb[0].mxu0 %v829
    %v902 = vpop.f32.mrb[0].mxu0
    %v903 = vadd.f32 0.0, %v902
    %v904 = vpop.f32.mrb[0].mxu0
    %905 = vdwg.mxu0
    %v906 = vmul.f32 %v814, %v898
    %v907 = vmul.f32 %v819, %v903
    %v908 = vld [vmem:[%s7] sm:$0xff]
    %v909 = vld [vmem:[%s7 + $0x8] sm:$0xff]
    %v910 = vld [vmem:[%s7 + $0x10] sm:$0xff]
    %v911 = vld [vmem:[%s7 + $0x18] sm:$0xff]
    %v912 = vld [vmem:[%s8] sm:$0x1]
    %v914 = vlaneseq
    %v915 = vshrl.u32 %v914, 7
    %v916 = vsub.s32 0, %v915
    %v917 = vrot.slane %v912, %v916
    %v920 = vsel %vm331, %v906, 0
    %v923 = vsel %vm331, %v907, 0
    %v926 = vsel %vm331, %v908, 0
    %v929 = vsel %vm331, %v909, 0
    %v932 = vsel %vm331, %v910, 0
    %v935 = vsel %vm331, %v911, 0
    %937 = vmatprep.subr.mxu0 0.0
    %938 = vmatpush1.xpose.msra.mxu0 %v926
    %939 = vmatprep.subr.mxu0 0.0
    %940 = vmatpush1.xpose.msra.mxu0 %v929
    %941 = vmatprep.subr.mxu0 0.0
    %942 = vmatpush1.xpose.msra.mxu0 %v932
    %943 = vmatprep.subr.mxu0 0.0
    %944 = vmatpush1.xpose.msra.mxu0 %v935
    %945 = vmatprep.subr.mxu0 0.0
    %946 = vmatpush1.xpose.msra.mxu0 0.0
    %947 = vmatprep.subr.mxu0 0.0
    %948 = vmatpush1.xpose.msra.mxu0 0.0
    %949 = vmatprep.subr.mxu0 0.0
    %950 = vmatpush1.xpose.msra.mxu0 0.0
    %951 = vmatprep.subr.mxu0 0.0
    %952 = vmatpush1.xpose.msra.mxu0 0.0
    %953 = vmatprep.subr.mxu0 0.0
    %954 = vmatpush1.xpose.msra.mxu0 0.0
    %955 = vmatprep.subr.mxu0 0.0
    %956 = vmatpush1.xpose.msra.mxu0 0.0
    %957 = vmatprep.subr.mxu0 0.0
    %958 = vmatpush1.xpose.msra.mxu0 0.0
    %959 = vmatprep.subr.mxu0 0.0
    %960 = vmatpush1.xpose.msra.mxu0 0.0
    %961 = vmatprep.subr.mxu0 0.0
    %962 = vmatpush1.xpose.msra.mxu0 0.0
    %963 = vmatprep.subr.mxu0 0.0
    %964 = vmatpush1.xpose.msra.mxu0 0.0
    %965 = vmatprep.subr.mxu0 0.0
    %966 = vmatpush1.xpose.msra.mxu0 0.0
    %967 = vmatprep.subr.mxu0 0.0
    %968 = vmatpush1.xpose.msra.mxu0 0.0
    %969 = vmatprep.subr.mxu0 0.0
    %970 = vmatpush1.xpose.msra.mxu0 0.0
    %971 = vmatprep.subr.mxu0 0.0
    %972 = vmatpush1.xpose.msra.mxu0 0.0
    %973 = vmatprep.subr.mxu0 0.0
    %974 = vmatpush1.xpose.msra.mxu0 0.0
    %975 = vmatprep.subr.mxu0 0.0
    %976 = vmatpush1.xpose.msra.mxu0 0.0
    %977 = vmatprep.subr.mxu0 0.0
    %978 = vmatpush1.xpose.msra.mxu0 0.0
    %979 = vmatprep.subr.mxu0 0.0
    %980 = vmatpush1.xpose.msra.mxu0 0.0
    %981 = vmatprep.subr.mxu0 0.0
    %982 = vmatpush1.xpose.msra.mxu0 0.0
    %983 = vmatprep.subr.mxu0 0.0
    %984 = vmatpush1.xpose.msra.mxu0 0.0
    %985 = vmatprep.subr.mxu0 0.0
    %986 = vmatpush1.xpose.msra.mxu0 0.0
    %987 = vmatprep.subr.mxu0 0.0
    %988 = vmatpush1.xpose.msra.mxu0 0.0
    %989 = vmatprep.subr.mxu0 0.0
    %990 = vmatpush1.xpose.msra.mxu0 0.0
    %991 = vmatprep.subr.mxu0 0.0
    %992 = vmatpush1.xpose.msra.mxu0 0.0
    %993 = vmatprep.subr.mxu0 0.0
    %994 = vmatpush1.xpose.msra.mxu0 0.0
    %995 = vmatprep.subr.mxu0 0.0
    %996 = vmatpush1.xpose.msra.mxu0 0.0
    %997 = vmatprep.subr.mxu0 0.0
    %998 = vmatpush1.xpose.msra.mxu0 0.0
    %999 = vmatprep.subr.mxu0 0.0
    %1000 = vmatpush1.xpose.msra.mxu0 0.0
    %1001 = vmatprep.mubr.f32.mxu0 0.0
    %1002 = vmatmul.mubr.f32.gmra.mrb[0].mxu0 %v920
    %v1003 = vpop.f32.mrb[0].mxu0
    %v1004 = vadd.f32 %v917, %v1003
    %v1005 = vpop.f32.mrb[0].mxu0
    %1006 = vmatprep.mubr.f32.mxu0 0.0
    %1007 = vmatmul.mubr.f32.gmra.mrb[0].mxu0 %v923
    %v1008 = vpop.f32.mrb[0].mxu0
    %v1009 = vadd.f32 %v917, %v1008
    %v1010 = vpop.f32.mrb[0].mxu0
    %1011 = vdwg.mxu0
    %1012 = vst.msk [vmem:[#allocation2] sm:$0xff] %vm331, %v1004
    %1013 = vst.msk [vmem:[#allocation2 + $0x8] sm:$0xff] %vm331, %v1009
    // Predicated region
    $region50: #{self_attention.1} parent=1 // pred_check
      _
    $region51: #{self_attention.1} parent=1 // pred_check_branch
      %1015 = sbr.rel (0) target = $region53
    $region52: #{self_attention.1} parent=1 // pred_region
      %s1017 = ssub.s32 256, 256
      %1018 = vsyncadd [#allocation3], %s1017
      %s1019 = sshll.u32 [#allocation2], 4
      %s1020 = int_to_ptr.vmem [resolvable:$true] %s1019
      %1025 = dma.vmem_to_hbm [thread:$0]  %s1020, 256, %s12, [#allocation3], 128, 128, 8
    $region53: #{self_attention.1} parent=1 // pred_fallthru
      _
    // Predicated region
    $region54: #{self_attention.1} parent=1 // pred_check
      _
    $region55: #{self_attention.1} parent=1 // pred_check_branch
      %1027 = sbr.rel (0) target = $region57
    $region56: #{self_attention.1} parent=1 // pred_region
      %1028 = dma.done [#allocation3], 256
    $region57: #{self_attention.1} parent=1 // pred_fallthru
      _
    %1029 = vsyncpa [#allocation3], 1

</llo_original>
